<compile_context>
chip_gen: v5e
topology: v5e:2x2
jax: 0.10.0
libtpu: 0.0.40
codegen_flags: <defaults>
</compile_context>

<pallas_src>
import functools

import jax
import jax.numpy as jnp
from jax import lax
from jax.experimental import pallas as pl
from jax.experimental.pallas import tpu as pltpu


def _largest_divisor_leq(n, cap):
    cap = int(max(1, min(cap, n)))
    for d in range(cap, 0, -1):
        if n % d == 0:
            return d
    return 1


def _vmem_capacity_bytes():
    try:
        cap = getattr(pltpu.get_tpu_info(), "vmem_capacity_bytes", None)
        if cap:
            return int(cap)
    except Exception:
        pass
    return 64 << 20  # conservative default (v7x has 64 MiB per TensorCore)


def _resident_spec(shape):
    """BlockSpec for a grid-invariant operand (constant index_map, single buffer)."""
    index_map = lambda b: (0,) * len(shape)
    try:
        return pl.BlockSpec(shape, index_map, pipeline_mode=pl.Buffered(1))
    except (TypeError, AttributeError):
        # pipeline_mode not available in this JAX build -> default double buffering.
        return pl.BlockSpec(shape, index_map)


def _patch_embed_kernel(patch_ref, w_ref, pos_ref, o_ref):
    """Fused patch-embed matmul + (cls | pos | bias) add with dense aligned stores.

    patch_ref: (TB, T, K)  im2col patches; row 0 of every image is zeros (cls slot)
    w_ref:     (K,  D)     flattened conv weight        (grid-invariant, resident)
    pos_ref:   (T,  D)     fused table: row 0 = cls + pos[0]; rows 1.. = pos[1:] + bias
    o_ref:     (TB, T, D)  output tokens (full block written from row 0 -> dense vst)
    """
    w = w_ref[...]
    pos = pos_ref[...]
    tb = patch_ref.shape[0]

    if tb == 1:
        acc = jnp.dot(patch_ref[0], w, preferred_element_type=jnp.float32)
        o_ref[0] = (acc + pos).astype(o_ref.dtype)
    else:
        def one_image(b, carry):
            acc = jnp.dot(patch_ref[b], w, preferred_element_type=jnp.float32)
            o_ref[b] = (acc + pos).astype(o_ref.dtype)
            return carry

        lax.fori_loop(0, tb, one_image, 0)


def patch_pos_embed_forward(x, conv_w, conv_b, cls_token, pos_embed, patch_size,
                            compute_dtype=None, out_dtype=None, batch_tile=None):
    """Replicates _patch_pos_embed.forward (no_embed_class=False, cls_token set).

    x:         (B, C, H, W)   NCHW
    conv_w:    (D, C, p, p)   Conv2d weight (PyTorch OIHW), stride == kernel == p
    conv_b:    (D,)
    cls_token: (1, 1, D)
    pos_embed: (1, 1 + N, D)
    returns:   (B, 1 + N, D)  in out_dtype (default x.dtype; pass bf16 to halve writeback)
    """
    B, C, H, W = x.shape
    D = conv_w.shape[0]
    p = patch_size
    gh, gw = H // p, W // p
    N = gh * gw
    T = 1 + N
    K = C * p * p
    if compute_dtype is None:
        compute_dtype = x.dtype
    if out_dtype is None:
        out_dtype = x.dtype

    # ---- host-side glue (one XLA copy fusion: im2col + zero cls row + downcast) -----
    # TODO(synk): fuse the NCHW -> (B, T, K) im2col into the kernel (grid over patch
    # rows with in-kernel rearrangement) to remove this extra HBM read+write of x.
    patches = x.reshape(B, C, gh, p, gw, p).transpose(0, 2, 4, 1, 3, 5).reshape(B, N, K)
    patches = jnp.pad(patches, ((0, 0), (1, 0), (0, 0)))    # zero row 0 == cls slot
    patches = patches.astype(compute_dtype)                 # (B, T, K)

    w_mat = conv_w.reshape(D, K).T.astype(compute_dtype)    # (K, D)

    # Fused pos table (f32 epilogue):
    #   row 0      = cls_token + pos_embed[0]   (picked up by the zero patch row)
    #   rows 1..N  = pos_embed[1:] + conv bias
    pos_tbl = pos_embed[0].astype(jnp.float32)                                   # (T, D)
    pos_full = jnp.concatenate(
        [pos_tbl[:1] + cls_token.reshape(1, D).astype(jnp.float32),
         pos_tbl[1:] + conv_b.astype(jnp.float32)[None, :]], axis=0)             # (T, D)

    # ---- batch tiling: generation-aware VMEM budget, grid >= 2 (>= 4 when possible) --
    c_sz = jnp.dtype(compute_dtype).itemsize
    o_sz = jnp.dtype(out_dtype).itemsize
    vmem_cap = _vmem_capacity_bytes()
    budget = int(vmem_cap * 0.55)                      # leave headroom (spills, scratch)
    per_img = 2 * T * K * c_sz + 2 * T * D * o_sz      # double-buffered in + out blocks
    fixed = 2 * (K * D * c_sz + T * D * 4)             # weight + pos (conservative 2x)
    acc_tmp = 2 * T * D * 4                            # f32 dot result + epilogue temp

    if batch_tile is None:
        tb_mem = max(1, (budget - fixed - acc_tmp - (2 << 20)) // max(per_img, 1))
        min_steps = 4 if B >= 8 else (2 if B >= 2 else 1)
        tb_cap = max(1, B // min_steps)
        TB = _largest_divisor_leq(B, min(tb_mem, tb_cap))
    else:
        TB = _largest_divisor_leq(B, batch_tile)

    need = fixed + TB * per_img + acc_tmp + (4 << 20)
    vmem_limit = int(min(max(need, 16 << 20), int(vmem_cap * 0.9)))

    cost = pl.CostEstimate(
        flops=2 * B * T * K * D,
        transcendentals=0,
        bytes_accessed=(B * T * K * c_sz + K * D * c_sz + T * D * 4
                        + B * T * D * o_sz),
    )

    out = pl.pallas_call(
        _patch_embed_kernel,
        out_shape=jax.ShapeDtypeStruct((B, T, D), out_dtype),
        grid_spec=pltpu.PrefetchScalarGridSpec(
            num_scalar_prefetch=0,
            grid=(B // TB,),
            in_specs=[
                pl.BlockSpec((TB, T, K), lambda b: (b, 0, 0)),   # patches: batch-tiled
                _resident_spec((K, D)),                          # weight: resident
                _resident_spec((T, D)),                          # fused pos: resident
            ],
            out_specs=pl.BlockSpec((TB, T, D), lambda b: (b, 0, 0)),
        ),
        compiler_params=pltpu.CompilerParams(
            dimension_semantics=("parallel",),
            vmem_limit_bytes=vmem_limit,
        ),
        cost_estimate=cost,
    )(patches, w_mat, pos_full)

    # TODO(synk): pos_drop is nn.Dropout -> identity in eval mode, so a no-op here.
    return out


if __name__ == "__main__":
    key = jax.random.PRNGKey(0)
    B, C, H, W = 2, 4, 16, 16
    p = 8
    D = 32
    N = (H // p) * (W // p)

    k0, k1, k2, k3, k4 = jax.random.split(key, 5)
    x = jax.random.normal(k0, (B, C, H, W), dtype=jnp.float32)
    conv_w = jax.random.normal(k1, (D, C, p, p), dtype=jnp.float32) * 0.02
    conv_b = jax.random.normal(k2, (D,), dtype=jnp.float32) * 0.02
    cls_token = jax.random.normal(k3, (1, 1, D), dtype=jnp.float32) * 0.02
    pos_embed = jax.random.normal(k4, (1, 1 + N, D), dtype=jnp.float32) * 0.02

    # Reference in plain JAX (lax conv == PyTorch Conv2d patch embed semantics).
    ref_patch = jax.lax.conv_general_dilated(
        x, conv_w, window_strides=(p, p), padding="VALID",
        dimension_numbers=("NCHW", "OIHW", "NCHW"),
    ) + conv_b[None, :, None, None]
    ref_tokens = ref_patch.reshape(B, D, N).transpose(0, 2, 1)        # (B, N, D)
    ref = jnp.concatenate(
        [jnp.broadcast_to(cls_token, (B, 1, D)), ref_tokens], axis=1) + pos_embed

    # f32 path (tight check).
    fwd_f32 = jax.jit(functools.partial(patch_pos_embed_forward, patch_size=p))
    out = fwd_f32(x, conv_w, conv_b, cls_token, pos_embed)
    jax.block_until_ready(out)
    assert out.shape == (B, 1 + N, D)
    assert jnp.allclose(out, ref, atol=1e-4, rtol=1e-4)

    # bf16 matmul inputs, f32 accumulate/epilogue (v5e/v6e/v7x MXU fast path) — loose check.
    fwd_bf16 = jax.jit(functools.partial(
        patch_pos_embed_forward, patch_size=p, compute_dtype=jnp.bfloat16))
    out_bf16 = fwd_bf16(x, conv_w, conv_b, cls_token, pos_embed)
    jax.block_until_ready(out_bf16)
    assert jnp.allclose(out_bf16, ref, atol=1e-1, rtol=1e-1)

    print("KERNEL_OK")
</pallas_src>

<mosaic_0001>
module attributes {stable_mosaic.version = 11 : i64} {
  func.func @_patch_embed_kernel(%arg0: i32, %arg1: memref<1x5x256xf32, #tpu.memory_space<vmem>>, %arg2: memref<256x32xf32, #tpu.memory_space<vmem>>, %arg3: memref<5x32xf32, #tpu.memory_space<vmem>>, %arg4: memref<1x5x32xf32, #tpu.memory_space<vmem>>) attributes {dimension_semantics = [#tpu.dimension_semantics<parallel>], iteration_bounds = array<i64: 2>, scalar_prefetch = 0 : i64, scratch_operands = 0 : i64, tpu.core_type = #tpu.core_type<tc>, window_params = [{transform_indices = @transform_0, window_bounds = array<i64: 1, 5, 256>}, {pipeline_mode = #tpu.pipeline_mode<synchronous>, transform_indices = @transform_1, window_bounds = array<i64: 256, 32>}, {pipeline_mode = #tpu.pipeline_mode<synchronous>, transform_indices = @transform_2, window_bounds = array<i64: 5, 32>}, {transform_indices = @transform_3, window_bounds = array<i64: 1, 5, 32>}]} {
    %c0 = arith.constant 0 : index
    %c0_0 = arith.constant 0 : index
    %0 = vector.load %arg2[%c0, %c0_0] : memref<256x32xf32, #tpu.memory_space<vmem>>, vector<256x32xf32>
    %c0_1 = arith.constant 0 : index
    %c0_2 = arith.constant 0 : index
    %1 = vector.load %arg3[%c0_1, %c0_2] : memref<5x32xf32, #tpu.memory_space<vmem>>, vector<5x32xf32>
    %c0_3 = arith.constant 0 : index
    %c0_4 = arith.constant 0 : index
    %c0_5 = arith.constant 0 : index
    %2 = vector.load %arg1[%c0_3, %c0_4, %c0_5] : memref<1x5x256xf32, #tpu.memory_space<vmem>>, vector<1x5x256xf32>
    %3 = vector.shape_cast %2 : vector<1x5x256xf32> to vector<5x256xf32>
    %cst = arith.constant dense<0.000000e+00> : vector<5x32xf32>
    %4 = tpu.matmul %3, %0, %cst {dimension_numbers = #tpu.dot_dimension_numbers<[1], [0], [0], [1], [0, 0, 1, 1], [], []>} : vector<5x256xf32>, vector<256x32xf32>, vector<5x32xf32> -> vector<5x32xf32>
    %5 = arith.addf %4, %1 : vector<5x32xf32>
    %c0_6 = arith.constant 0 : index
    %c0_7 = arith.constant 0 : index
    %c0_8 = arith.constant 0 : index
    %6 = vector.load %arg4[%c0_6, %c0_7, %c0_8] : memref<1x5x32xf32, #tpu.memory_space<vmem>>, vector<1x5x32xf32>
    %7 = vector.shape_cast %6 : vector<1x5x32xf32> to vector<5x32xf32>
    %8 = vector.shape_cast %5 : vector<5x32xf32> to vector<1x5x32xf32>
    tpu.vector_store %arg4[%c0_6, %c0_7, %c0_8], %8 {strides = array<i32>} : memref<1x5x32xf32, #tpu.memory_space<vmem>>, vector<1x5x32xf32>,
    return
  }
  func.func @transform_0(%arg0: i32) -> (i32, i32, i32) {
    %c0_i32 = arith.constant 0 : i32
    %c0_i32_0 = arith.constant 0 : i32
    %c0_i32_1 = arith.constant 0 : i32
    return %arg0, %c0_i32, %c0_i32_0 : i32, i32, i32
  }
  func.func @transform_1(%arg0: i32) -> (i32, i32) {
    %c0_i32 = arith.constant 0 : i32
    %c0_i32_0 = arith.constant 0 : i32
    %c0_i32_1 = arith.constant 0 : i32
    return %c0_i32, %c0_i32_0 : i32, i32
  }
  func.func @transform_2(%arg0: i32) -> (i32, i32) {
    %c0_i32 = arith.constant 0 : i32
    %c0_i32_0 = arith.constant 0 : i32
    %c0_i32_1 = arith.constant 0 : i32
    return %c0_i32, %c0_i32_0 : i32, i32
  }
  func.func @transform_3(%arg0: i32) -> (i32, i32, i32) {
    %c0_i32 = arith.constant 0 : i32
    %c0_i32_0 = arith.constant 0 : i32
    %c0_i32_1 = arith.constant 0 : i32
    return %arg0, %c0_i32, %c0_i32_0 : i32, i32, i32
  }
}

</mosaic_0001>

<llo_original>
// kernel: patch_pos_embed_forward.1
$region0: #{patch_pos_embed_forward.1}
  #allocation0 [shape = 'u32[]', space=smem, size = 0x4, offset = 0x4, fixed_abs, tag = 'smem constant byte address 0x4 - core index']
  #allocation1 [shape = 'u32[72,128]{1,0:T(1,128)}', space=vmem, size = 0x9000, scoped, tag = 'internal scratch']
  %s0 = inlined_call_operand.vmem [shape: f32[2,5,256], index: 0, kind: input, shape index: {}]
  %s1 = inlined_call_operand.vmem [shape: f32[256,32], index: 1, kind: input, shape index: {}]
  %s2 = inlined_call_operand.vmem [shape: f32[5,32], index: 2, kind: input, shape index: {}]
  %s3 = inlined_call_operand.vmem [shape: f32[2,5,32], index: 3, kind: output, shape index: {}]
  %s4 = sld [smem:[#allocation0]]
  $region45: #{patch_pos_embed_forward.1} parent=0
    _
  %s6 = ssub.s32 1, %s4
  %s7 = scalar_select 0, %s6, %s4
  loop: start=0, step=1, limit=4
  $region2: #{patch_pos_embed_forward.1} parent=0 // loop_pre_header
    _
  $region3: #{patch_pos_embed_forward.1} parent=0 // loop_header
    %s9 = sphi 0, %s13
    %p10 = scmp.ge.s32.totalorder %s9, 4
    %s19 = sphi 0, %s21
    %s22 = sphi 0, %s19
    %s23 = sphi 0, %s22
    %s39 = sphi 0, %s23
    %s43 = sphi 0, %s43
    %s45 = sphi 0, %s43
    %s46 = sphi 0, %s45
    %s60 = sphi 0, %s46
    %s64 = sphi 0, %s64
    %s66 = sphi 0, %s64
    %s67 = sphi 0, %s66
    %s81 = sphi 0, %s67
    %s87 = sphi 0, %s89
    %s90 = sphi 0, %s87
    %s91 = sphi 0, %s90
    %s107 = sphi 0, %s91
  $region4: #{patch_pos_embed_forward.1} parent=0 // loop_header_branch
    %12 = sbr.rel (%p10) target = $region8
  $region5: #{patch_pos_embed_forward.1} parent=0 // loop_body
    %s14 = ssub.s32 %s9, 1
    %s15 = ssub.s32 %s9, 2
    %s16 = sadd.s32 %s9, 1
    %s17 = ssub.s32 %s9, %s16
    %p18 = scmp.eq.s32.totalorder %s17, 0
    %s20 = sadd.s32 %s19, 1
    %s21 = scalar_select %p18, %s19, %s20
    %p24 = pneg %p18
    %p25 = scmp.eq.s32.totalorder %s9, 1
    %p26 = por %p24, %p25
    %p27 = scmp.ne.s32.totalorder %s19, %s22
    %p28 = scmp.eq.s32.totalorder %s9, 0
    %p29 = por %p27, %p28
    %p30 = scmp.ne.s32.totalorder %s19, %s22
    %p31 = scmp.eq.s32.totalorder %s14, 1
    %p32 = por %p30, %p31
    %p33 = scmp.ne.s32.totalorder %s22, %s23
    %p34 = scmp.eq.s32.totalorder %s14, 0
    %p35 = por %p33, %p34
    %p36 = scmp.ne.s32.totalorder %s22, %s23
    %p37 = scmp.eq.s32.totalorder %s15, 1
    %p38 = por %p36, %p37
    %p40 = scmp.ne.s32.totalorder %s23, %s39
    %p41 = scmp.eq.s32.totalorder %s15, 0
    %p42 = por %p40, %p41
    %s44 = sadd.s32 %s43, 1
    %p47 = scmp.eq.s32.totalorder %s9, 1
    %p48 = scmp.ne.s32.totalorder %s43, %s45
    %p49 = scmp.eq.s32.totalorder %s9, 0
    %p50 = por %p48, %p49
    %p51 = scmp.ne.s32.totalorder %s43, %s45
    %p52 = scmp.eq.s32.totalorder %s14, 1
    %p53 = por %p51, %p52
    %p54 = scmp.ne.s32.totalorder %s45, %s46
    %p55 = scmp.eq.s32.totalorder %s14, 0
    %p56 = por %p54, %p55
    %p57 = scmp.ne.s32.totalorder %s45, %s46
    %p58 = scmp.eq.s32.totalorder %s15, 1
    %p59 = por %p57, %p58
    %p61 = scmp.ne.s32.totalorder %s46, %s60
    %p62 = scmp.eq.s32.totalorder %s15, 0
    %p63 = por %p61, %p62
    %s65 = sadd.s32 %s64, 1
    %p68 = scmp.eq.s32.totalorder %s9, 1
    %p69 = scmp.ne.s32.totalorder %s64, %s66
    %p70 = scmp.eq.s32.totalorder %s9, 0
    %p71 = por %p69, %p70
    %p72 = scmp.ne.s32.totalorder %s64, %s66
    %p73 = scmp.eq.s32.totalorder %s14, 1
    %p74 = por %p72, %p73
    %p75 = scmp.ne.s32.totalorder %s66, %s67
    %p76 = scmp.eq.s32.totalorder %s14, 0
    %p77 = por %p75, %p76
    %p78 = scmp.ne.s32.totalorder %s66, %s67
    %p79 = scmp.eq.s32.totalorder %s15, 1
    %p80 = por %p78, %p79
    %p82 = scmp.ne.s32.totalorder %s67, %s81
    %p83 = scmp.eq.s32.totalorder %s15, 0
    %p84 = por %p82, %p83
    %s85 = ssub.s32 %s9, %s16
    %p86 = scmp.eq.s32.totalorder %s85, 0
    %s88 = sadd.s32 %s87, 1
    %s89 = scalar_select %p86, %s87, %s88
    %p92 = pneg %p86
    %p93 = scmp.eq.s32.totalorder %s9, 1
    %p94 = por %p92, %p93
    %p95 = scmp.ne.s32.totalorder %s87, %s90
    %p96 = scmp.eq.s32.totalorder %s9, 0
    %p97 = por %p95, %p96
    %p98 = scmp.ne.s32.totalorder %s87, %s90
    %p99 = scmp.eq.s32.totalorder %s14, 1
    %p100 = por %p98, %p99
    %p101 = scmp.ne.s32.totalorder %s90, %s91
    %p102 = scmp.eq.s32.totalorder %s14, 0
    %p103 = por %p101, %p102
    %p104 = scmp.ne.s32.totalorder %s90, %s91
    %p105 = scmp.eq.s32.totalorder %s15, 1
    %p106 = por %p104, %p105
    %p108 = scmp.ne.s32.totalorder %s91, %s107
    %p109 = scmp.eq.s32.totalorder %s15, 0
    %p110 = por %p108, %p109
    %p111 = scmp.le.s32.totalorder 1, %s9
    %p112 = scmp.lt.s32.totalorder %s9, 3
    %p113 = pnand %p111, %p112
    %p114 = pneg %p113
    // Predicated region
    $region9: #{patch_pos_embed_forward.1} parent=5 // pred_check
      _
    $region10: #{patch_pos_embed_forward.1} parent=5 // pred_check_branch
      %116 = sbr.rel (%p113) target = $region12
    $region11: #{patch_pos_embed_forward.1} parent=5 // pred_region
      %s117 = ssub.s32 %s9, 1
      // Predicated region
      $region13: #{patch_pos_embed_forward.1} parent=11 // pred_check
        %p118 = pneg %p56
      $region14: #{patch_pos_embed_forward.1} parent=11 // pred_check_branch
        %120 = sbr.rel (%p118) target = $region16
      $region15: #{patch_pos_embed_forward.1} parent=11 // pred_region
        _
      $region16: #{patch_pos_embed_forward.1} parent=11 // pred_fallthru
        _
      // Predicated region
      $region17: #{patch_pos_embed_forward.1} parent=11 // pred_check
        %p121 = pneg %p77
      $region18: #{patch_pos_embed_forward.1} parent=11 // pred_check_branch
        %123 = sbr.rel (%p121) target = $region20
      $region19: #{patch_pos_embed_forward.1} parent=11 // pred_region
        _
      $region20: #{patch_pos_embed_forward.1} parent=11 // pred_fallthru
        _
    $region12: #{patch_pos_embed_forward.1} parent=5 // pred_fallthru
      _
    %p124 = scmp.lt.s32.totalorder %s9, 2
    // Predicated region
    $region21: #{patch_pos_embed_forward.1} parent=5 // pred_check
      %p125 = pneg %p124
    $region22: #{patch_pos_embed_forward.1} parent=5 // pred_check_branch
      %127 = sbr.rel (%p125) target = $region24
    $region23: #{patch_pos_embed_forward.1} parent=5 // pred_region
      // Predicated region
      $region25: #{patch_pos_embed_forward.1} parent=23 // pred_check
        %p128 = pneg %p29
      $region26: #{patch_pos_embed_forward.1} parent=23 // pred_check_branch
        %130 = sbr.rel (%p128) target = $region28
      $region27: #{patch_pos_embed_forward.1} parent=23 // pred_region
        %p131 = scmp.lt.s32.totalorder %s9, 1
        %s132 = scalar_select %p131, %s9, 1
        %s133 = smul.addr %s132, 2
        %s134 = smul.addr %s133, 8
        %s135 = scalar_lea.vmem %s0, %s134
      $region28: #{patch_pos_embed_forward.1} parent=23 // pred_fallthru
        _
    $region24: #{patch_pos_embed_forward.1} parent=5 // pred_fallthru
      _
    %p136 = scmp.le.s32.totalorder 1, %s9
    %p137 = scmp.lt.s32.totalorder %s9, 3
    %p138 = pnand %p136, %p137
    %p139 = pneg %p138
    // Predicated region
    $region29: #{patch_pos_embed_forward.1} parent=5 // pred_check
      _
    $region30: #{patch_pos_embed_forward.1} parent=5 // pred_check_branch
      %141 = sbr.rel (%p138) target = $region32
    $region31: #{patch_pos_embed_forward.1} parent=5 // pred_region
      %s142 = ssub.s32 %s9, 1
      %p143 = scmp.lt.s32.totalorder %s14, 1
      %s144 = scalar_select %p143, %s14, 1
      %s145 = smul.addr %s144, 2
      %s146 = smul.addr %s145, 8
      %s147 = scalar_lea.vmem %s0, %s146
      %p148 = pneg %p35
      %p149 = pneg %p32
      %p150 = pneg %p56
      %p151 = pneg %p53
      %p152 = pneg %p77
      %p153 = pneg %p74
      %p154 = pneg %p103
      %p155 = pneg %p100
      %p156 = scmp.lt.s32.totalorder %s14, 1
      %s157 = scalar_select %p156, %s14, 1
      %s158 = smul.addr %s157, 8
      %s159 = scalar_lea.vmem %s3, %s158
      %p160 = scmp.lt.s32.totalorder %s14, 1
      %s161 = scalar_select %p160, %s14, 1
      %s162 = smul.addr %s161, 2
      %s163 = smul.addr %s162, 8
      %s164 = scalar_lea.vmem %s0, %s163
      %p165 = scmp.lt.s32.totalorder %s14, 1
      %s166 = scalar_select %p165, %s14, 1
      %s167 = smul.addr %s166, 8
      %s168 = scalar_lea.vmem %s3, %s167
      %v169 = vld [vmem:[%s1] sm:$0xff]
      %v170 = vld [vmem:[%s1 + $0x8] sm:$0xff]
      %v171 = vld [vmem:[%s1 + $0x10] sm:$0xff]
      %v172 = vld [vmem:[%s1 + $0x18] sm:$0xff]
      %v173 = vld [vmem:[%s1 + $0x20] sm:$0xff]
      %v174 = vld [vmem:[%s1 + $0x28] sm:$0xff]
      %v175 = vld [vmem:[%s1 + $0x30] sm:$0xff]
      %v176 = vld [vmem:[%s1 + $0x38] sm:$0xff]
      %v177 = vld [vmem:[%s1 + $0x40] sm:$0xff]
      %v178 = vld [vmem:[%s1 + $0x48] sm:$0xff]
      %v179 = vld [vmem:[%s1 + $0x50] sm:$0xff]
      %v180 = vld [vmem:[%s1 + $0x58] sm:$0xff]
      %v181 = vld [vmem:[%s1 + $0x60] sm:$0xff]
      %v182 = vld [vmem:[%s1 + $0x68] sm:$0xff]
      %v183 = vld [vmem:[%s1 + $0x70] sm:$0xff]
      %v184 = vld [vmem:[%s1 + $0x78] sm:$0xff]
      %v185 = vld [vmem:[%s1 + $0x80] sm:$0xff]
      %v186 = vld [vmem:[%s1 + $0x88] sm:$0xff]
      %v187 = vld [vmem:[%s1 + $0x90] sm:$0xff]
      %v188 = vld [vmem:[%s1 + $0x98] sm:$0xff]
      %v189 = vld [vmem:[%s1 + $0xa0] sm:$0xff]
      %v190 = vld [vmem:[%s1 + $0xa8] sm:$0xff]
      %v191 = vld [vmem:[%s1 + $0xb0] sm:$0xff]
      %v192 = vld [vmem:[%s1 + $0xb8] sm:$0xff]
      %v193 = vld [vmem:[%s1 + $0xc0] sm:$0xff]
      %v194 = vld [vmem:[%s1 + $0xc8] sm:$0xff]
      %v195 = vld [vmem:[%s1 + $0xd0] sm:$0xff]
      %v196 = vld [vmem:[%s1 + $0xd8] sm:$0xff]
      %v197 = vld [vmem:[%s1 + $0xe0] sm:$0xff]
      %v198 = vld [vmem:[%s1 + $0xe8] sm:$0xff]
      %v199 = vld [vmem:[%s1 + $0xf0] sm:$0xff]
      %v200 = vld [vmem:[%s1 + $0xf8] sm:$0xff]
      %v201 = vld [vmem:[%s2] sm:$0x1f]
      %v202 = vld [vmem:[%s164] sm:$0x1f]
      %v203 = vld [vmem:[%s164 + $0x8] sm:$0x1f]
      %204 = vmatpush.msra.mxu0 %v184
      %205 = vmatpush.msra.mxu0 %v183
      %206 = vmatpush.msra.mxu0 %v182
      %207 = vmatpush.msra.mxu0 %v181
      %208 = vmatpush.msra.mxu0 %v180
      %209 = vmatpush.msra.mxu0 %v179
      %210 = vmatpush.msra.mxu0 %v178
      %211 = vmatpush.msra.mxu0 %v177
      %212 = vmatpush.msra.mxu0 %v176
      %213 = vmatpush.msra.mxu0 %v175
      %214 = vmatpush.msra.mxu0 %v174
      %215 = vmatpush.msra.mxu0 %v173
      %216 = vmatpush.msra.mxu0 %v172
      %217 = vmatpush.msra.mxu0 %v171
      %218 = vmatpush.msra.mxu0 %v170
      %219 = vmatpush.msra.mxu0 %v169
      %220 = vmatmul.f32.gmra.mxu0 %v202
      %v221 = vpop.f32.mrf.mxu0
      %v222 = vadd.f32 %v201, %v221
      %223 = vdwg.mxu0
      %224 = vmatpush.msra.mxu0 %v200
      %225 = vmatpush.msra.mxu0 %v199
      %226 = vmatpush.msra.mxu0 %v198
      %227 = vmatpush.msra.mxu0 %v197
      %228 = vmatpush.msra.mxu0 %v196
      %229 = vmatpush.msra.mxu0 %v195
      %230 = vmatpush.msra.mxu0 %v194
      %231 = vmatpush.msra.mxu0 %v193
      %232 = vmatpush.msra.mxu0 %v192
      %233 = vmatpush.msra.mxu0 %v191
      %234 = vmatpush.msra.mxu0 %v190
      %235 = vmatpush.msra.mxu0 %v189
      %236 = vmatpush.msra.mxu0 %v188
      %237 = vmatpush.msra.mxu0 %v187
      %238 = vmatpush.msra.mxu0 %v186
      %239 = vmatpush.msra.mxu0 %v185
      %240 = vmatmul.f32.gmra.mxu0 %v203
      %v241 = vpop.f32.mrf.mxu0
      %v242 = vadd.f32 %v222, %v241
      %243 = vdwg.mxu0
      %vm244 = vcmask 258048
      %245 = vst.msk [vmem:[%s168] sm:$0x1f] %vm244, %v242
      %p246 = scmp.lt.s32.totalorder %s14, 1
      %s247 = scalar_select %p246, %s14, 1
      %s248 = smul.addr %s247, 8
      %s249 = scalar_lea.vmem %s3, %s248
      // Predicated region
      $region33: #{patch_pos_embed_forward.1} parent=31 // pred_check
        %p250 = pneg %p100
      $region34: #{patch_pos_embed_forward.1} parent=31 // pred_check_branch
        %252 = sbr.rel (%p250) target = $region36
      $region35: #{patch_pos_embed_forward.1} parent=31 // pred_region
        _
      $region36: #{patch_pos_embed_forward.1} parent=31 // pred_fallthru
        _
    $region32: #{patch_pos_embed_forward.1} parent=5 // pred_fallthru
      _
    %p253 = scmp.le.s32.totalorder 2, %s9
    // Predicated region
    $region37: #{patch_pos_embed_forward.1} parent=5 // pred_check
      %p254 = pneg %p253
    $region38: #{patch_pos_embed_forward.1} parent=5 // pred_check_branch
      %256 = sbr.rel (%p254) target = $region40
    $region39: #{patch_pos_embed_forward.1} parent=5 // pred_region
      %s257 = ssub.s32 %s9, 2
      // Predicated region
      $region41: #{patch_pos_embed_forward.1} parent=39 // pred_check
        %p258 = pneg %p106
      $region42: #{patch_pos_embed_forward.1} parent=39 // pred_check_branch
        %260 = sbr.rel (%p258) target = $region44
      $region43: #{patch_pos_embed_forward.1} parent=39 // pred_region
        %p261 = scmp.lt.s32.totalorder %s15, 1
        %s262 = scalar_select %p261, %s15, 1
        %s263 = smul.addr %s262, 8
        %s264 = scalar_lea.vmem %s3, %s263
      $region44: #{patch_pos_embed_forward.1} parent=39 // pred_fallthru
        _
    $region40: #{patch_pos_embed_forward.1} parent=5 // pred_fallthru
      _
  $region6: #{patch_pos_embed_forward.1} parent=0 // loop_footer
    %s13 = sadd.s32 1, %s9
  $region7: #{patch_pos_embed_forward.1} parent=0 // loop_footer_branch
    %8 = sbr.rel target = $region3
  $region8: #{patch_pos_embed_forward.1} parent=0 // loop_exit
    _

</llo_original>
